<compile_context>
chip_gen: v7x
topology: tpu7x:2x2x1
jax: 0.10.0
libtpu: 0.0.40
codegen_flags: <defaults>
</compile_context>

<pallas_src>
import functools

import jax
import jax.numpy as jnp
import numpy as np
from jax.experimental import pallas as pl
from jax.experimental.pallas import tpu as pltpu


def _round_up(x, m):
    return (x + m - 1) // m * m


# ----------------------------------------------------------------------------
# Fast path (stride == 1): lane-dense (rows, W*C-on-lanes) layout, batch
# stacked along rows, single grid step.
# ----------------------------------------------------------------------------
def _dpcbn_kernel_lane_dense(x_ref, dw_ref, b1_ref, wbd_ref, b2_ref, o_ref, *,
                             N, KH, KW, dilation, Ho, Hp_pad, Cin, Wo, TILE_WO):
    # x_ref  : (N*Hp_pad, WpC_pad)        padded input slabs, batch on rows
    # dw_ref : (KH*KW, Wo*Cin)            depthwise taps (BN1 scale folded)
    # b1_ref : (1, Wo*Cin)                folded BN1 shift
    # wbd_ref: (TILE_WO*Cin, TILE_WO*Cout) block-diag 1x1 weights (BN2 folded)
    # b2_ref : (1, Wo*Cout)               folded BN2 shift
    # o_ref  : (N*Ho, Wo*Cout)
    WoC = Wo * Cin
    dw = dw_ref[...].astype(jnp.float32)   # loaded once, hoisted
    b1 = b1_ref[...].astype(jnp.float32)
    wbd = wbd_ref[...].astype(jnp.float32)
    b2 = b2_ref[...].astype(jnp.float32)

    # Depthwise conv: KH*KW full-width VPU FMAs per batch slab.  Each tap is a
    # static ref slice (row offset n*Hp_pad + kh*dilation, lane offset
    # kw*dilation*Cin) so Mosaic folds the offsets straight into the loads.
    ys = []
    for n in range(N):                        # static unroll over batch slabs
        acc = jnp.zeros((Ho, WoC), jnp.float32)
        for kh in range(KH):
            r0 = n * Hp_pad + kh * dilation
            for kw in range(KW):
                l0 = kw * dilation * Cin
                tap = x_ref[r0:r0 + Ho, l0:l0 + WoC].astype(jnp.float32)
                acc = acc + tap * dw[kh * KW + kw:kh * KW + kw + 1, :]
        # BN1 (scale folded into dw) shift + ReLU.
        ys.append(jnp.maximum(acc + b1, 0.0))
    y = ys[0] if N == 1 else jnp.concatenate(ys, axis=0)        # (N*Ho, Wo*Cin)

    # Pointwise 1x1 conv as block-diagonal matmuls on the MXU, tiled along Wo
    # so the weight is TILE_WO^2*Cin*Cout instead of Wo^2*Cin*Cout.
    # (f32 inputs kept on purpose: bf16 would not meet the 1e-4 tolerance.)
    n_tiles = Wo // TILE_WO
    outs = []
    for t in range(n_tiles):
        yt = y[:, t * TILE_WO * Cin:(t + 1) * TILE_WO * Cin]
        outs.append(jnp.dot(yt, wbd, preferred_element_type=jnp.float32))
    z = outs[0] if n_tiles == 1 else jnp.concatenate(outs, axis=1)
    # BN2 (scale folded into wbd) shift + ReLU; full-width lane-dense store.
    z = jnp.maximum(z + b2, 0.0)
    o_ref[...] = z.astype(o_ref.dtype)


# ----------------------------------------------------------------------------
# General fallback (stride > 1): channels-on-lanes compute, lane-dense store.
# ----------------------------------------------------------------------------
def _dpcbn_kernel_general(x_ref, dw_ref, b1_ref, pw_ref, b2_ref, o_ref, *,
                          KH, KW, stride, dilation, Ho, Wo, Cin, Cout):
    x = x_ref[0].astype(jnp.float32)             # (Hp, Wp, Cin)
    dw = dw_ref[...].astype(jnp.float32)         # (KH*KW, Cin), BN1 folded
    acc = jnp.zeros((Ho, Wo, Cin), jnp.float32)
    for kh in range(KH):
        for kw in range(KW):
            patch = jax.lax.slice(
                x,
                (kh * dilation, kw * dilation, 0),
                (kh * dilation + (Ho - 1) * stride + 1,
                 kw * dilation + (Wo - 1) * stride + 1,
                 Cin),
                (stride, stride, 1))
            acc = acc + patch * dw[kh * KW + kw].reshape(1, 1, Cin)
    y = jnp.maximum(acc + b1_ref[0].reshape(1, 1, Cin), 0.0)
    y2 = jnp.dot(y.reshape(Ho * Wo, Cin), pw_ref[...].astype(jnp.float32),
                 preferred_element_type=jnp.float32)
    z = jnp.maximum(y2 + b2_ref[...], 0.0)
    o_ref[0] = z.reshape(Ho, Wo * Cout).astype(o_ref.dtype)


def dpcbn_forward(x_nchw, dw_w, pw_w, bn1, bn2, *, stride=1, padding=0,
                  dilation=1, eps=1e-5):
    """x_nchw: (N, Cin, H, W); dw_w: (Cin, 1, KH, KW); pw_w: (Cout, Cin, 1, 1)."""
    N, Cin, H, W = x_nchw.shape
    KH, KW = dw_w.shape[2], dw_w.shape[3]
    Cout = pw_w.shape[0]
    out_dtype = x_nchw.dtype

    Ho = (H + 2 * padding - dilation * (KH - 1) - 1) // stride + 1
    Wo = (W + 2 * padding - dilation * (KW - 1) - 1) // stride + 1
    Hp = H + 2 * padding
    Wp = W + 2 * padding

    # Fold BatchNorm (inference mode, running stats) into scale/shift and then
    # fold the scales into the conv weights (keeps only bias adds in-kernel).
    # TODO(synk): BatchNorm is implemented in inference mode (running stats),
    # not training-mode batch statistics.
    g1, be1, m1, v1 = bn1
    g2, be2, m2, v2 = bn2
    s1 = (g1 / jnp.sqrt(v1 + eps)).astype(jnp.float32)
    sh1 = (be1 - m1 * s1).astype(jnp.float32)
    s2 = (g2 / jnp.sqrt(v2 + eps)).astype(jnp.float32)
    sh2 = (be2 - m2 * s2).astype(jnp.float32)

    # Depthwise taps (KH*KW, Cin) with BN1 scale folded per channel.
    dwt = jnp.transpose(dw_w[:, 0], (1, 2, 0)).reshape(KH * KW, Cin)
    dwt = dwt.astype(jnp.float32) * s1[None, :]
    # Pointwise weight (Cin, Cout) with BN2 scale folded per output channel.
    pw = jnp.transpose(pw_w[:, :, 0, 0], (1, 0)).astype(jnp.float32) * s2[None, :]

    # NCHW -> NHWC glue (wrapper side).
    # TODO(synk): a NCHW-direct kernel layout / in-kernel zero padding would
    # remove these wrapper HBM read+write passes, which dominate at tiny sizes.
    x = jnp.transpose(x_nchw, (0, 2, 3, 1))

    if stride == 1:
        assert Ho == Hp - dilation * (KH - 1) and Wo == Wp - dilation * (KW - 1)
        WoC = Wo * Cin
        WoCout = Wo * Cout
        Hp_pad = _round_up(Hp, 8)                     # sublane-aligned slabs
        WpC_pad = _round_up(Wp * Cin, 128)            # lane-aligned slabs

        # Conv zero-pad + alignment pad (padded rows/lanes are never read by
        # the tap slices since kh*d + Ho <= Hp and kw*d*Cin + WoC <= Wp*Cin).
        x = jnp.pad(x, ((0, 0), (padding, padding + (Hp_pad - Hp)),
                        (padding, padding), (0, 0)))
        x_flat = x.reshape(N, Hp_pad, Wp * Cin)
        x_flat = jnp.pad(x_flat, ((0, 0), (0, 0), (0, WpC_pad - Wp * Cin)))
        # Stack batch along the row axis -> one grid step, one launch.
        x_stack = x_flat.reshape(N * Hp_pad, WpC_pad)

        # Lane-tiled depthwise weights / biases.
        dw_lane = jnp.tile(dwt, (1, Wo))                          # (taps, Wo*Cin)
        b1_lane = jnp.tile(sh1, Wo).reshape(1, WoC)
        b2_lane = jnp.tile(sh2, Wo).reshape(1, WoCout)

        # Block-diagonal pointwise weight, tiled along Wo (TILE_WO <= 32) so it
        # never scales as Wo^2 (VMEM-safe on v7x's smaller scoped VMEM).
        max_tile = 32
        if Wo <= max_tile:
            tile_wo = Wo
        else:
            tile_wo = max(t for t in range(1, max_tile + 1) if Wo % t == 0)
        wbd_tile = jnp.kron(jnp.eye(tile_wo, dtype=jnp.float32), pw)

        kernel = functools.partial(
            _dpcbn_kernel_lane_dense, N=N, KH=KH, KW=KW, dilation=dilation,
            Ho=Ho, Hp_pad=Hp_pad, Cin=Cin, Wo=Wo, TILE_WO=tile_wo)

        # TODO(synk): for very large H*W add row tiling with halo
        # (grid=(N, Ho/TILE_H)) to keep the slab under the v7x scoped-VMEM limit.
        out_flat = pl.pallas_call(
            kernel,
            out_shape=jax.ShapeDtypeStruct((N * Ho, WoCout), out_dtype),
            grid=(1,),
            in_specs=[
                pl.BlockSpec((N * Hp_pad, WpC_pad), lambda i: (0, 0)),
                pl.BlockSpec((KH * KW, WoC), lambda i: (0, 0)),
                pl.BlockSpec((1, WoC), lambda i: (0, 0)),
                pl.BlockSpec((tile_wo * Cin, tile_wo * Cout), lambda i: (0, 0)),
                pl.BlockSpec((1, WoCout), lambda i: (0, 0)),
            ],
            out_specs=pl.BlockSpec((N * Ho, WoCout), lambda i: (0, 0)),
            compiler_params=pltpu.CompilerParams(
                dimension_semantics=("arbitrary",)),
        )(x_stack, dw_lane, b1_lane, wbd_tile, b2_lane)

        out_nhwc = out_flat.reshape(N, Ho, Wo, Cout)
    else:
        # TODO(synk): stride > 1 breaks the flat (W*C)-on-lanes tap slicing
        # (would need a strided lane gather); use the channels-on-lanes
        # fallback (lane-dense output) instead.
        x = jnp.pad(x, ((0, 0), (padding, padding), (padding, padding), (0, 0)))
        kernel = functools.partial(
            _dpcbn_kernel_general, KH=KH, KW=KW, stride=stride,
            dilation=dilation, Ho=Ho, Wo=Wo, Cin=Cin, Cout=Cout)
        out_flat = pl.pallas_call(
            kernel,
            out_shape=jax.ShapeDtypeStruct((N, Ho, Wo * Cout), out_dtype),
            grid=(N,),
            in_specs=[
                pl.BlockSpec((1, Hp, Wp, Cin), lambda n: (n, 0, 0, 0)),
                pl.BlockSpec((KH * KW, Cin), lambda n: (0, 0)),
                pl.BlockSpec((1, Cin), lambda n: (0, 0)),
                pl.BlockSpec((Cin, Cout), lambda n: (0, 0)),
                pl.BlockSpec((1, Cout), lambda n: (0, 0)),
            ],
            out_specs=pl.BlockSpec((1, Ho, Wo * Cout), lambda n: (n, 0, 0)),
            compiler_params=pltpu.CompilerParams(
                dimension_semantics=("parallel",)),
        )(x, dwt, sh1.reshape(1, Cin), pw, sh2.reshape(1, Cout))
        out_nhwc = out_flat.reshape(N, Ho, Wo, Cout)

    return jnp.transpose(out_nhwc, (0, 3, 1, 2))


def dpcbn_reference(x, dw_w, pw_w, bn1, bn2, *, stride, padding, dilation,
                    eps=1e-5):
    """Pure-JAX (XLA conv) reference, NCHW, for correctness checking."""
    def bn(y, params):
        g, b, m, v = params
        return ((y - m[None, :, None, None])
                / jnp.sqrt(v + eps)[None, :, None, None]
                * g[None, :, None, None] + b[None, :, None, None])

    y = jax.lax.conv_general_dilated(
        x, dw_w, window_strides=(stride, stride),
        padding=((padding, padding), (padding, padding)),
        rhs_dilation=(dilation, dilation),
        dimension_numbers=("NCHW", "OIHW", "NCHW"),
        feature_group_count=x.shape[1])
    y = jnp.maximum(bn(y, bn1), 0.0)
    y = jax.lax.conv_general_dilated(
        y, pw_w, window_strides=(1, 1), padding="VALID",
        dimension_numbers=("NCHW", "OIHW", "NCHW"))
    y = jnp.maximum(bn(y, bn2), 0.0)
    return y


if __name__ == "__main__":
    # Module config: DPCBN(in_channels=4, out_channels=8, k_size=3, stride=1,
    #                      padding=1, dilation=1)
    N, Cin, H, W = 2, 4, 16, 16
    Cout, K = 8, 3
    stride, padding, dilation = 1, 1, 1

    key = jax.random.PRNGKey(0)
    (kx, kdw, kpw, kg1, kb1, km1, kv1,
     kg2, kb2, km2, kv2) = jax.random.split(key, 11)

    x = jax.random.normal(kx, (N, Cin, H, W), jnp.float32)

    # Deterministic synthetic parameters (shapes match nn.Conv2d / nn.BatchNorm2d).
    dw_w = jax.random.normal(kdw, (Cin, 1, K, K), jnp.float32) * 0.3
    pw_w = jax.random.normal(kpw, (Cout, Cin, 1, 1), jnp.float32) * 0.3
    bn1 = (1.0 + 0.1 * jax.random.normal(kg1, (Cin,), jnp.float32),   # gamma
           0.1 * jax.random.normal(kb1, (Cin,), jnp.float32),         # beta
           0.1 * jax.random.normal(km1, (Cin,), jnp.float32),         # running_mean
           0.5 + jax.random.uniform(kv1, (Cin,), jnp.float32))        # running_var
    bn2 = (1.0 + 0.1 * jax.random.normal(kg2, (Cout,), jnp.float32),
           0.1 * jax.random.normal(kb2, (Cout,), jnp.float32),
           0.1 * jax.random.normal(km2, (Cout,), jnp.float32),
           0.5 + jax.random.uniform(kv2, (Cout,), jnp.float32))

    out = dpcbn_forward(x, dw_w, pw_w, bn1, bn2, stride=stride,
                        padding=padding, dilation=dilation)
    out = jax.block_until_ready(out)

    ref = dpcbn_reference(x, dw_w, pw_w, bn1, bn2, stride=stride,
                          padding=padding, dilation=dilation)
    ref = jax.block_until_ready(ref)

    assert out.shape == (N, Cout, H, W), out.shape
    np.testing.assert_allclose(np.asarray(out), np.asarray(ref),
                               rtol=1e-4, atol=1e-4)
    print("KERNEL_OK")
</pallas_src>

<mosaic_0001>
module attributes {stable_mosaic.version = 11 : i64} {
  func.func @_dpcbn_kernel_lane_dense(%arg0: i32, %arg1: memref<48x128xf32, #tpu.memory_space<vmem>>, %arg2: memref<9x64xf32, #tpu.memory_space<vmem>>, %arg3: memref<1x64xf32, #tpu.memory_space<vmem>>, %arg4: memref<64x128xf32, #tpu.memory_space<vmem>>, %arg5: memref<1x128xf32, #tpu.memory_space<vmem>>, %arg6: memref<32x128xf32, #tpu.memory_space<vmem>>) attributes {dimension_semantics = [#tpu.dimension_semantics<arbitrary>], iteration_bounds = array<i64: 1>, scalar_prefetch = 0 : i64, scratch_operands = 0 : i64, tpu.core_type = #tpu.core_type<tc>, window_params = [{pipeline_mode = #tpu.pipeline_mode<synchronous>, transform_indices = @transform_0, window_bounds = array<i64: 48, 128>}, {pipeline_mode = #tpu.pipeline_mode<synchronous>, transform_indices = @transform_1, window_bounds = array<i64: 9, 64>}, {pipeline_mode = #tpu.pipeline_mode<synchronous>, transform_indices = @transform_2, window_bounds = array<i64: 1, 64>}, {pipeline_mode = #tpu.pipeline_mode<synchronous>, transform_indices = @transform_3, window_bounds = array<i64: 64, 128>}, {pipeline_mode = #tpu.pipeline_mode<synchronous>, transform_indices = @transform_4, window_bounds = array<i64: 1, 128>}, {pipeline_mode = #tpu.pipeline_mode<synchronous>, transform_indices = @transform_5, window_bounds = array<i64: 32, 128>}]} {
    %c0 = arith.constant 0 : index
    %c0_0 = arith.constant 0 : index
    %0 = vector.load %arg2[%c0, %c0_0] : memref<9x64xf32, #tpu.memory_space<vmem>>, vector<9x64xf32>
    %c0_1 = arith.constant 0 : index
    %c0_2 = arith.constant 0 : index
    %1 = vector.load %arg3[%c0_1, %c0_2] : memref<1x64xf32, #tpu.memory_space<vmem>>, vector<1x64xf32>
    %c0_3 = arith.constant 0 : index
    %c0_4 = arith.constant 0 : index
    %2 = vector.load %arg4[%c0_3, %c0_4] : memref<64x128xf32, #tpu.memory_space<vmem>>, vector<64x128xf32>
    %c0_5 = arith.constant 0 : index
    %c0_6 = arith.constant 0 : index
    %3 = vector.load %arg5[%c0_5, %c0_6] : memref<1x128xf32, #tpu.memory_space<vmem>>, vector<1x128xf32>
    %cst = arith.constant 0.000000e+00 : f32
    %4 = vector.broadcast %cst : f32 to vector<16x64xf32>
    %c0_7 = arith.constant 0 : index
    %c0_8 = arith.constant 0 : index
    %5 = vector.load %arg1[%c0_7, %c0_8] : memref<48x128xf32, #tpu.memory_space<vmem>>, vector<16x64xf32>
    %6 = vector.extract_strided_slice %0 {offsets = [0, 0], sizes = [1, 64], strides = [1, 1]} : vector<9x64xf32> to vector<1x64xf32>
    %7 = vector.broadcast %6 : vector<1x64xf32> to vector<16x64xf32>
    %8 = arith.mulf %5, %7 : vector<16x64xf32>
    %9 = arith.addf %4, %8 : vector<16x64xf32>
    %c0_9 = arith.constant 0 : index
    %c4 = arith.constant 4 : index
    %10 = vector.load %arg1[%c0_9, %c4] : memref<48x128xf32, #tpu.memory_space<vmem>>, vector<16x64xf32>
    %11 = vector.extract_strided_slice %0 {offsets = [1, 0], sizes = [1, 64], strides = [1, 1]} : vector<9x64xf32> to vector<1x64xf32>
    %12 = vector.broadcast %11 : vector<1x64xf32> to vector<16x64xf32>
    %13 = arith.mulf %10, %12 : vector<16x64xf32>
    %14 = arith.addf %9, %13 : vector<16x64xf32>
    %c0_10 = arith.constant 0 : index
    %c8 = arith.constant 8 : index
    %15 = vector.load %arg1[%c0_10, %c8] : memref<48x128xf32, #tpu.memory_space<vmem>>, vector<16x64xf32>
    %16 = vector.extract_strided_slice %0 {offsets = [2, 0], sizes = [1, 64], strides = [1, 1]} : vector<9x64xf32> to vector<1x64xf32>
    %17 = vector.broadcast %16 : vector<1x64xf32> to vector<16x64xf32>
    %18 = arith.mulf %15, %17 : vector<16x64xf32>
    %19 = arith.addf %14, %18 : vector<16x64xf32>
    %c1 = arith.constant 1 : index
    %c0_11 = arith.constant 0 : index
    %20 = vector.load %arg1[%c1, %c0_11] : memref<48x128xf32, #tpu.memory_space<vmem>>, vector<16x64xf32>
    %21 = vector.extract_strided_slice %0 {offsets = [3, 0], sizes = [1, 64], strides = [1, 1]} : vector<9x64xf32> to vector<1x64xf32>
    %22 = vector.broadcast %21 : vector<1x64xf32> to vector<16x64xf32>
    %23 = arith.mulf %20, %22 : vector<16x64xf32>
    %24 = arith.addf %19, %23 : vector<16x64xf32>
    %c1_12 = arith.constant 1 : index
    %c4_13 = arith.constant 4 : index
    %25 = vector.load %arg1[%c1_12, %c4_13] : memref<48x128xf32, #tpu.memory_space<vmem>>, vector<16x64xf32>
    %26 = vector.extract_strided_slice %0 {offsets = [4, 0], sizes = [1, 64], strides = [1, 1]} : vector<9x64xf32> to vector<1x64xf32>
    %27 = vector.broadcast %26 : vector<1x64xf32> to vector<16x64xf32>
    %28 = arith.mulf %25, %27 : vector<16x64xf32>
    %29 = arith.addf %24, %28 : vector<16x64xf32>
    %c1_14 = arith.constant 1 : index
    %c8_15 = arith.constant 8 : index
    %30 = vector.load %arg1[%c1_14, %c8_15] : memref<48x128xf32, #tpu.memory_space<vmem>>, vector<16x64xf32>
    %31 = vector.extract_strided_slice %0 {offsets = [5, 0], sizes = [1, 64], strides = [1, 1]} : vector<9x64xf32> to vector<1x64xf32>
    %32 = vector.broadcast %31 : vector<1x64xf32> to vector<16x64xf32>
    %33 = arith.mulf %30, %32 : vector<16x64xf32>
    %34 = arith.addf %29, %33 : vector<16x64xf32>
    %c2 = arith.constant 2 : index
    %c0_16 = arith.constant 0 : index
    %35 = vector.load %arg1[%c2, %c0_16] : memref<48x128xf32, #tpu.memory_space<vmem>>, vector<16x64xf32>
    %36 = vector.extract_strided_slice %0 {offsets = [6, 0], sizes = [1, 64], strides = [1, 1]} : vector<9x64xf32> to vector<1x64xf32>
    %37 = vector.broadcast %36 : vector<1x64xf32> to vector<16x64xf32>
    %38 = arith.mulf %35, %37 : vector<16x64xf32>
    %39 = arith.addf %34, %38 : vector<16x64xf32>
    %c2_17 = arith.constant 2 : index
    %c4_18 = arith.constant 4 : index
    %40 = vector.load %arg1[%c2_17, %c4_18] : memref<48x128xf32, #tpu.memory_space<vmem>>, vector<16x64xf32>
    %41 = vector.extract_strided_slice %0 {offsets = [7, 0], sizes = [1, 64], strides = [1, 1]} : vector<9x64xf32> to vector<1x64xf32>
    %42 = vector.broadcast %41 : vector<1x64xf32> to vector<16x64xf32>
    %43 = arith.mulf %40, %42 : vector<16x64xf32>
    %44 = arith.addf %39, %43 : vector<16x64xf32>
    %c2_19 = arith.constant 2 : index
    %c8_20 = arith.constant 8 : index
    %45 = vector.load %arg1[%c2_19, %c8_20] : memref<48x128xf32, #tpu.memory_space<vmem>>, vector<16x64xf32>
    %46 = vector.extract_strided_slice %0 {offsets = [8, 0], sizes = [1, 64], strides = [1, 1]} : vector<9x64xf32> to vector<1x64xf32>
    %47 = vector.broadcast %46 : vector<1x64xf32> to vector<16x64xf32>
    %48 = arith.mulf %45, %47 : vector<16x64xf32>
    %49 = arith.addf %44, %48 : vector<16x64xf32>
    %50 = vector.broadcast %1 : vector<1x64xf32> to vector<16x64xf32>
    %51 = arith.addf %49, %50 : vector<16x64xf32>
    %cst_21 = arith.constant 0.000000e+00 : f32
    %52 = vector.broadcast %cst_21 : f32 to vector<16x64xf32>
    %53 = arith.maximumf %51, %52 : vector<16x64xf32>
    %cst_22 = arith.constant 0.000000e+00 : f32
    %54 = vector.broadcast %cst_22 : f32 to vector<16x64xf32>
    %c24 = arith.constant 24 : index
    %c0_23 = arith.constant 0 : index
    %55 = vector.load %arg1[%c24, %c0_23] : memref<48x128xf32, #tpu.memory_space<vmem>>, vector<16x64xf32>
    %56 = vector.extract_strided_slice %0 {offsets = [0, 0], sizes = [1, 64], strides = [1, 1]} : vector<9x64xf32> to vector<1x64xf32>
    %57 = vector.broadcast %56 : vector<1x64xf32> to vector<16x64xf32>
    %58 = arith.mulf %55, %57 : vector<16x64xf32>
    %59 = arith.addf %54, %58 : vector<16x64xf32>
    %c24_24 = arith.constant 24 : index
    %c4_25 = arith.constant 4 : index
    %60 = vector.load %arg1[%c24_24, %c4_25] : memref<48x128xf32, #tpu.memory_space<vmem>>, vector<16x64xf32>
    %61 = vector.extract_strided_slice %0 {offsets = [1, 0], sizes = [1, 64], strides = [1, 1]} : vector<9x64xf32> to vector<1x64xf32>
    %62 = vector.broadcast %61 : vector<1x64xf32> to vector<16x64xf32>
    %63 = arith.mulf %60, %62 : vector<16x64xf32>
    %64 = arith.addf %59, %63 : vector<16x64xf32>
    %c24_26 = arith.constant 24 : index
    %c8_27 = arith.constant 8 : index
    %65 = vector.load %arg1[%c24_26, %c8_27] : memref<48x128xf32, #tpu.memory_space<vmem>>, vector<16x64xf32>
    %66 = vector.extract_strided_slice %0 {offsets = [2, 0], sizes = [1, 64], strides = [1, 1]} : vector<9x64xf32> to vector<1x64xf32>
    %67 = vector.broadcast %66 : vector<1x64xf32> to vector<16x64xf32>
    %68 = arith.mulf %65, %67 : vector<16x64xf32>
    %69 = arith.addf %64, %68 : vector<16x64xf32>
    %c25 = arith.constant 25 : index
    %c0_28 = arith.constant 0 : index
    %70 = vector.load %arg1[%c25, %c0_28] : memref<48x128xf32, #tpu.memory_space<vmem>>, vector<16x64xf32>
    %71 = vector.extract_strided_slice %0 {offsets = [3, 0], sizes = [1, 64], strides = [1, 1]} : vector<9x64xf32> to vector<1x64xf32>
    %72 = vector.broadcast %71 : vector<1x64xf32> to vector<16x64xf32>
    %73 = arith.mulf %70, %72 : vector<16x64xf32>
    %74 = arith.addf %69, %73 : vector<16x64xf32>
    %c25_29 = arith.constant 25 : index
    %c4_30 = arith.constant 4 : index
    %75 = vector.load %arg1[%c25_29, %c4_30] : memref<48x128xf32, #tpu.memory_space<vmem>>, vector<16x64xf32>
    %76 = vector.extract_strided_slice %0 {offsets = [4, 0], sizes = [1, 64], strides = [1, 1]} : vector<9x64xf32> to vector<1x64xf32>
    %77 = vector.broadcast %76 : vector<1x64xf32> to vector<16x64xf32>
    %78 = arith.mulf %75, %77 : vector<16x64xf32>
    %79 = arith.addf %74, %78 : vector<16x64xf32>
    %c25_31 = arith.constant 25 : index
    %c8_32 = arith.constant 8 : index
    %80 = vector.load %arg1[%c25_31, %c8_32] : memref<48x128xf32, #tpu.memory_space<vmem>>, vector<16x64xf32>
    %81 = vector.extract_strided_slice %0 {offsets = [5, 0], sizes = [1, 64], strides = [1, 1]} : vector<9x64xf32> to vector<1x64xf32>
    %82 = vector.broadcast %81 : vector<1x64xf32> to vector<16x64xf32>
    %83 = arith.mulf %80, %82 : vector<16x64xf32>
    %84 = arith.addf %79, %83 : vector<16x64xf32>
    %c26 = arith.constant 26 : index
    %c0_33 = arith.constant 0 : index
    %85 = vector.load %arg1[%c26, %c0_33] : memref<48x128xf32, #tpu.memory_space<vmem>>, vector<16x64xf32>
    %86 = vector.extract_strided_slice %0 {offsets = [6, 0], sizes = [1, 64], strides = [1, 1]} : vector<9x64xf32> to vector<1x64xf32>
    %87 = vector.broadcast %86 : vector<1x64xf32> to vector<16x64xf32>
    %88 = arith.mulf %85, %87 : vector<16x64xf32>
    %89 = arith.addf %84, %88 : vector<16x64xf32>
    %c26_34 = arith.constant 26 : index
    %c4_35 = arith.constant 4 : index
    %90 = vector.load %arg1[%c26_34, %c4_35] : memref<48x128xf32, #tpu.memory_space<vmem>>, vector<16x64xf32>
    %91 = vector.extract_strided_slice %0 {offsets = [7, 0], sizes = [1, 64], strides = [1, 1]} : vector<9x64xf32> to vector<1x64xf32>
    %92 = vector.broadcast %91 : vector<1x64xf32> to vector<16x64xf32>
    %93 = arith.mulf %90, %92 : vector<16x64xf32>
    %94 = arith.addf %89, %93 : vector<16x64xf32>
    %c26_36 = arith.constant 26 : index
    %c8_37 = arith.constant 8 : index
    %95 = vector.load %arg1[%c26_36, %c8_37] : memref<48x128xf32, #tpu.memory_space<vmem>>, vector<16x64xf32>
    %96 = vector.extract_strided_slice %0 {offsets = [8, 0], sizes = [1, 64], strides = [1, 1]} : vector<9x64xf32> to vector<1x64xf32>
    %97 = vector.broadcast %96 : vector<1x64xf32> to vector<16x64xf32>
    %98 = arith.mulf %95, %97 : vector<16x64xf32>
    %99 = arith.addf %94, %98 : vector<16x64xf32>
    %100 = vector.broadcast %1 : vector<1x64xf32> to vector<16x64xf32>
    %101 = arith.addf %99, %100 : vector<16x64xf32>
    %cst_38 = arith.constant 0.000000e+00 : f32
    %102 = vector.broadcast %cst_38 : f32 to vector<16x64xf32>
    %103 = arith.maximumf %101, %102 : vector<16x64xf32>
    %104 = tpu.concatenate %53, %103 in 0 : vector<16x64xf32>, vector<16x64xf32> -> vector<32x64xf32>
    %cst_39 = arith.constant dense<0.000000e+00> : vector<32x128xf32>
    %105 = tpu.matmul %104, %2, %cst_39 {dimension_numbers = #tpu.dot_dimension_numbers<[1], [0], [0], [1], [0, 0, 1, 1], [], []>} : vector<32x64xf32>, vector<64x128xf32>, vector<32x128xf32> -> vector<32x128xf32>
    %106 = vector.broadcast %3 : vector<1x128xf32> to vector<32x128xf32>
    %107 = arith.addf %105, %106 : vector<32x128xf32>
    %cst_40 = arith.constant 0.000000e+00 : f32
    %108 = vector.broadcast %cst_40 : f32 to vector<32x128xf32>
    %109 = arith.maximumf %107, %108 : vector<32x128xf32>
    %c0_41 = arith.constant 0 : index
    %c0_42 = arith.constant 0 : index
    %110 = vector.load %arg6[%c0_41, %c0_42] : memref<32x128xf32, #tpu.memory_space<vmem>>, vector<32x128xf32>
    tpu.vector_store %arg6[%c0_41, %c0_42], %109 {strides = array<i32>} : memref<32x128xf32, #tpu.memory_space<vmem>>, vector<32x128xf32>,
    return
  }
  func.func @transform_0(%arg0: i32) -> (i32, i32) {
    %c0_i32 = arith.constant 0 : i32
    %c0_i32_0 = arith.constant 0 : i32
    %c0_i32_1 = arith.constant 0 : i32
    return %c0_i32, %c0_i32_0 : i32, i32
  }
  func.func @transform_1(%arg0: i32) -> (i32, i32) {
    %c0_i32 = arith.constant 0 : i32
    %c0_i32_0 = arith.constant 0 : i32
    %c0_i32_1 = arith.constant 0 : i32
    return %c0_i32, %c0_i32_0 : i32, i32
  }
  func.func @transform_2(%arg0: i32) -> (i32, i32) {
    %c0_i32 = arith.constant 0 : i32
    %c0_i32_0 = arith.constant 0 : i32
    %c0_i32_1 = arith.constant 0 : i32
    return %c0_i32, %c0_i32_0 : i32, i32
  }
  func.func @transform_3(%arg0: i32) -> (i32, i32) {
    %c0_i32 = arith.constant 0 : i32
    %c0_i32_0 = arith.constant 0 : i32
    %c0_i32_1 = arith.constant 0 : i32
    return %c0_i32, %c0_i32_0 : i32, i32
  }
  func.func @transform_4(%arg0: i32) -> (i32, i32) {
    %c0_i32 = arith.constant 0 : i32
    %c0_i32_0 = arith.constant 0 : i32
    %c0_i32_1 = arith.constant 0 : i32
    return %c0_i32, %c0_i32_0 : i32, i32
  }
  func.func @transform_5(%arg0: i32) -> (i32, i32) {
    %c0_i32 = arith.constant 0 : i32
    %c0_i32_0 = arith.constant 0 : i32
    %c0_i32_1 = arith.constant 0 : i32
    return %c0_i32, %c0_i32_0 : i32, i32
  }
}

</mosaic_0001>

<llo_original>
// kernel: tpu_custom_call.1
$region0: #{tpu_custom_call.1}
  #allocation0 [shape = 'u32[]', space=smem, size = 0x4, offset = 0x4, fixed_abs, tag = 'smem constant byte address 0x4 - core index']
  #allocation1 [shape = 'u32[144,128]{1,0:T(1,128)}', space=vmem, size = 0x12000, scoped, tag = 'internal scratch']
  %s0 = inlined_call_operand.hbm [shape: f32[48,128], index: 0, kind: input, shape index: {}]
  %s1 = inlined_call_operand.hbm [shape: f32[9,64], index: 1, kind: input, shape index: {}]
  %s2 = inlined_call_operand.vmem [shape: f32[1,64], index: 2, kind: input, shape index: {}]
  %s3 = inlined_call_operand.hbm [shape: f32[64,128], index: 3, kind: input, shape index: {}]
  %s4 = inlined_call_operand.vmem [shape: f32[1,128], index: 4, kind: input, shape index: {}]
  %s5 = inlined_call_operand.hbm [shape: f32[32,128], index: 5, kind: output, shape index: {}]
  %s6 = sld [smem:[#allocation0]]
  $region42: #{tpu_custom_call.1} parent=0
    _
  %s8 = ssub.s32 1, %s6
  %s9 = scalar_select 0, %s8, %s6
  $region1: #{tpu_custom_call.1} parent=0
    #allocation2 [shape = 'u8[24576]{0}', space=vmem, size = 0x6000, scoped, tag = 'input window, operand 0, single buffered']
    #allocation3 [shape = 's32[1]{0}', space=sflag, size = 0x4, scoped, tag = 'scoped memory for tpu_custom_call.1']
    #allocation4 [shape = 's32[1]{0}', space=sflag, size = 0x4, scoped, tag = 'scoped memory for tpu_custom_call.1']
    #allocation5 [shape = 'u8[8192]{0}', space=vmem, size = 0x2000, scoped, tag = 'input window, operand 1, single buffered']
    #allocation6 [shape = 's32[1]{0}', space=sflag, size = 0x4, scoped, tag = 'scoped memory for tpu_custom_call.1']
    #allocation7 [shape = 'u8[32768]{0}', space=vmem, size = 0x8000, scoped, tag = 'input window, operand 3, single buffered']
    #allocation8 [shape = 'u8[16384]{0}', space=vmem, size = 0x4000, scoped, tag = 'output window, operand 0, single buffered']
    %10 = vsyncpa [#allocation3], 0
    %11 = vsyncpa [#allocation6], 0
    %12 = vsyncpa [#allocation4], 0
    // Predicated region
    $region2: #{tpu_custom_call.1} parent=1 // pred_check
      _
    $region3: #{tpu_custom_call.1} parent=1 // pred_check_branch
      %14 = sbr.rel (0) target = $region5
    $region4: #{tpu_custom_call.1} parent=1 // pred_region
      %s16 = ssub.s32 768, 768
      %17 = vsyncadd [#allocation3], %s16
      %s18 = sshll.u32 [#allocation2], 4
      %s19 = int_to_ptr.vmem [resolvable:$true] %s18
      %24 = dma.hbm_to_vmem [thread:$0]  %s0, 768, %s19, [#allocation3], 128, 128, 8
    $region5: #{tpu_custom_call.1} parent=1 // pred_fallthru
      _
    // Predicated region
    $region6: #{tpu_custom_call.1} parent=1 // pred_check
      _
    $region7: #{tpu_custom_call.1} parent=1 // pred_check_branch
      %26 = sbr.rel (0) target = $region9
    $region8: #{tpu_custom_call.1} parent=1 // pred_region
      %s28 = ssub.s32 256, 256
      %29 = vsyncadd [#allocation6], %s28
      %s30 = sshll.u32 [#allocation5], 4
      %s31 = int_to_ptr.vmem [resolvable:$true] %s30
      %36 = dma.hbm_to_vmem [thread:$0]  %s1, 256, %s31, [#allocation6], 128, 128, 8
    $region9: #{tpu_custom_call.1} parent=1 // pred_fallthru
      _
    // Predicated region
    $region10: #{tpu_custom_call.1} parent=1 // pred_check
      _
    $region11: #{tpu_custom_call.1} parent=1 // pred_check_branch
      %38 = sbr.rel (0) target = $region13
    $region12: #{tpu_custom_call.1} parent=1 // pred_region
      _
    $region13: #{tpu_custom_call.1} parent=1 // pred_fallthru
      _
    // Predicated region
    $region14: #{tpu_custom_call.1} parent=1 // pred_check
      _
    $region15: #{tpu_custom_call.1} parent=1 // pred_check_branch
      %40 = sbr.rel (0) target = $region17
    $region16: #{tpu_custom_call.1} parent=1 // pred_region
      %s42 = ssub.s32 1024, 1024
      %43 = vsyncadd [#allocation6], %s42
      %s44 = sshll.u32 [#allocation7], 4
      %s45 = int_to_ptr.vmem [resolvable:$true] %s44
      %50 = dma.hbm_to_vmem [thread:$0]  %s3, 1024, %s45, [#allocation6], 128, 128, 8
    $region17: #{tpu_custom_call.1} parent=1 // pred_fallthru
      _
    // Predicated region
    $region18: #{tpu_custom_call.1} parent=1 // pred_check
      _
    $region19: #{tpu_custom_call.1} parent=1 // pred_check_branch
      %52 = sbr.rel (0) target = $region21
    $region20: #{tpu_custom_call.1} parent=1 // pred_region
      _
    $region21: #{tpu_custom_call.1} parent=1 // pred_fallthru
      _
    // Predicated region
    $region22: #{tpu_custom_call.1} parent=1 // pred_check
      _
    $region23: #{tpu_custom_call.1} parent=1 // pred_check_branch
      %54 = sbr.rel (0) target = $region25
    $region24: #{tpu_custom_call.1} parent=1 // pred_region
      %55 = dma.done [#allocation3], 768
    $region25: #{tpu_custom_call.1} parent=1 // pred_fallthru
      _
    // Predicated region
    $region26: #{tpu_custom_call.1} parent=1 // pred_check
      _
    $region27: #{tpu_custom_call.1} parent=1 // pred_check_branch
      %57 = sbr.rel (0) target = $region29
    $region28: #{tpu_custom_call.1} parent=1 // pred_region
      %58 = dma.done [#allocation6], 256
    $region29: #{tpu_custom_call.1} parent=1 // pred_fallthru
      _
    // Predicated region
    $region30: #{tpu_custom_call.1} parent=1 // pred_check
      _
    $region31: #{tpu_custom_call.1} parent=1 // pred_check_branch
      %60 = sbr.rel (0) target = $region33
    $region32: #{tpu_custom_call.1} parent=1 // pred_region
      %61 = dma.done [#allocation6], 1024
    $region33: #{tpu_custom_call.1} parent=1 // pred_fallthru
      _
    %v62 = vld [vmem:[#allocation5] sm:$0xff]
    %v63 = vld [vmem:[#allocation5 + $0x8] sm:$0x1]
    %v64 = vld [vmem:[%s2] sm:$0x1]
    %v65 = vld [vmem:[#allocation7] sm:$0xff]
    %v66 = vld [vmem:[#allocation7 + $0x8] sm:$0xff]
    %v67 = vld [vmem:[#allocation7 + $0x10] sm:$0xff]
    %v68 = vld [vmem:[#allocation7 + $0x18] sm:$0xff]
    %v69 = vld [vmem:[#allocation7 + $0x20] sm:$0xff]
    %v70 = vld [vmem:[#allocation7 + $0x28] sm:$0xff]
    %v71 = vld [vmem:[#allocation7 + $0x30] sm:$0xff]
    %v72 = vld [vmem:[#allocation7 + $0x38] sm:$0xff]
    %v73 = vld [vmem:[%s4] sm:$0x1]
    %v74 = vld [vmem:[#allocation2] sm:$0xff]
    %v75 = vld [vmem:[#allocation2 + $0x8] sm:$0xff]
    %v76 = vlaneseq
    %v77 = vshrl.u32 %v76, 7
    %v78 = vsub.s32 0, %v77
    %v79 = vrot.slane %v62, %v78
    %v80 = vmul.f32 %v74, %v79
    %v81 = vmul.f32 %v75, %v79
    %v82 = vadd.f32 %v80, 0.0
    %v83 = vadd.f32 %v81, 0.0
    %v84 = vlaneseq
    %v85 = vshrl.u32 %v84, 7
    %v86 = vsub.s32 1, %v85
    %v87 = vrot.slane %v62, %v86
    %89 = vrot.lane.b32.xlu0 %v87, 4
    %v90 = vpop.permute.xlu0 %89
    %v92 = vmul.f32 %v74, %v90
    %v93 = vmul.f32 %v75, %v90
    %96 = vrot.lane.b32.xlu0 %v92, 124
    %v97 = vpop.permute.xlu0 %96
    %98 = vrot.lane.b32.xlu0 %v93, 124
    %v99 = vpop.permute.xlu0 %98
    %v102 = vadd.f32 %v82, %v97
    %v103 = vadd.f32 %v83, %v99
    %v104 = vlaneseq
    %v105 = vshrl.u32 %v104, 7
    %v106 = vsub.s32 2, %v105
    %v107 = vrot.slane %v62, %v106
    %109 = vrot.lane.b32.xlu0 %v107, 8
    %v110 = vpop.permute.xlu0 %109
    %v112 = vmul.f32 %v74, %v110
    %v113 = vmul.f32 %v75, %v110
    %116 = vrot.lane.b32.xlu0 %v112, 120
    %v117 = vpop.permute.xlu0 %116
    %118 = vrot.lane.b32.xlu0 %v113, 120
    %v119 = vpop.permute.xlu0 %118
    %v122 = vadd.f32 %v102, %v117
    %v123 = vadd.f32 %v103, %v119
    %v124 = vld [vmem:[#allocation2 + $0x1] sm:$0xff]
    %v125 = vld [vmem:[#allocation2 + $0x9] sm:$0xff]
    %v126 = vlaneseq
    %v127 = vshrl.u32 %v126, 7
    %v128 = vsub.s32 3, %v127
    %v129 = vrot.slane %v62, %v128
    %v130 = vmul.f32 %v124, %v129
    %v131 = vmul.f32 %v125, %v129
    %v132 = vadd.f32 %v122, %v130
    %v133 = vadd.f32 %v123, %v131
    %v134 = vlaneseq
    %v135 = vshrl.u32 %v134, 7
    %v136 = vsub.s32 4, %v135
    %v137 = vrot.slane %v62, %v136
    %139 = vrot.lane.b32.xlu0 %v137, 4
    %v140 = vpop.permute.xlu0 %139
    %v142 = vmul.f32 %v124, %v140
    %v143 = vmul.f32 %v125, %v140
    %146 = vrot.lane.b32.xlu0 %v142, 124
    %v147 = vpop.permute.xlu0 %146
    %148 = vrot.lane.b32.xlu0 %v143, 124
    %v149 = vpop.permute.xlu0 %148
    %v152 = vadd.f32 %v132, %v147
    %v153 = vadd.f32 %v133, %v149
    %v154 = vlaneseq
    %v155 = vshrl.u32 %v154, 7
    %v156 = vsub.s32 5, %v155
    %v157 = vrot.slane %v62, %v156
    %159 = vrot.lane.b32.xlu0 %v157, 8
    %v160 = vpop.permute.xlu0 %159
    %v162 = vmul.f32 %v124, %v160
    %v163 = vmul.f32 %v125, %v160
    %166 = vrot.lane.b32.xlu0 %v162, 120
    %v167 = vpop.permute.xlu0 %166
    %168 = vrot.lane.b32.xlu0 %v163, 120
    %v169 = vpop.permute.xlu0 %168
    %v172 = vadd.f32 %v152, %v167
    %v173 = vadd.f32 %v153, %v169
    %v174 = vld [vmem:[#allocation2 + $0x2] sm:$0xff]
    %v175 = vld [vmem:[#allocation2 + $0xa] sm:$0xff]
    %v176 = vlaneseq
    %v177 = vshrl.u32 %v176, 7
    %v178 = vsub.s32 6, %v177
    %v179 = vrot.slane %v62, %v178
    %v180 = vmul.f32 %v174, %v179
    %v181 = vmul.f32 %v175, %v179
    %v182 = vadd.f32 %v172, %v180
    %v183 = vadd.f32 %v173, %v181
    %v184 = vlaneseq
    %v185 = vshrl.u32 %v184, 7
    %v186 = vsub.s32 7, %v185
    %v187 = vrot.slane %v62, %v186
    %189 = vrot.lane.b32.xlu0 %v187, 4
    %v190 = vpop.permute.xlu0 %189
    %v192 = vmul.f32 %v174, %v190
    %v193 = vmul.f32 %v175, %v190
    %196 = vrot.lane.b32.xlu0 %v192, 124
    %v197 = vpop.permute.xlu0 %196
    %198 = vrot.lane.b32.xlu0 %v193, 124
    %v199 = vpop.permute.xlu0 %198
    %v202 = vadd.f32 %v182, %v197
    %v203 = vadd.f32 %v183, %v199
    %v204 = vlaneseq
    %v205 = vshrl.u32 %v204, 7
    %v206 = vsub.s32 0, %v205
    %v207 = vrot.slane %v63, %v206
    %209 = vrot.lane.b32.xlu0 %v207, 8
    %v210 = vpop.permute.xlu0 %209
    %v212 = vmul.f32 %v174, %v210
    %v213 = vmul.f32 %v175, %v210
    %216 = vrot.lane.b32.xlu0 %v212, 120
    %v217 = vpop.permute.xlu0 %216
    %218 = vrot.lane.b32.xlu0 %v213, 120
    %v219 = vpop.permute.xlu0 %218
    %v222 = vadd.f32 %v202, %v217
    %v223 = vadd.f32 %v203, %v219
    %v225 = vlaneseq
    %v226 = vshrl.u32 %v225, 7
    %v227 = vsub.s32 0, %v226
    %v228 = vrot.slane %v64, %v227
    %v230 = vadd.f32 %v222, %v228
    %v231 = vadd.f32 %v223, %v228
    %v232 = vmax.f32 %v230, 0.0
    %v233 = vmax.f32 %v231, 0.0
    %v234 = vld [vmem:[#allocation2 + $0x18] sm:$0xff]
    %v235 = vld [vmem:[#allocation2 + $0x20] sm:$0xff]
    %v236 = vmul.f32 %v234, %v79
    %v237 = vmul.f32 %v235, %v79
    %v238 = vadd.f32 %v236, 0.0
    %v239 = vadd.f32 %v237, 0.0
    %v240 = vmul.f32 %v234, %v90
    %v241 = vmul.f32 %v235, %v90
    %244 = vrot.lane.b32.xlu0 %v240, 124
    %v245 = vpop.permute.xlu0 %244
    %246 = vrot.lane.b32.xlu0 %v241, 124
    %v247 = vpop.permute.xlu0 %246
    %v250 = vadd.f32 %v238, %v245
    %v251 = vadd.f32 %v239, %v247
    %v252 = vmul.f32 %v234, %v110
    %v253 = vmul.f32 %v235, %v110
    %256 = vrot.lane.b32.xlu0 %v252, 120
    %v257 = vpop.permute.xlu0 %256
    %258 = vrot.lane.b32.xlu0 %v253, 120
    %v259 = vpop.permute.xlu0 %258
    %v262 = vadd.f32 %v250, %v257
    %v263 = vadd.f32 %v251, %v259
    %v264 = vld [vmem:[#allocation2 + $0x19] sm:$0xff]
    %v265 = vld [vmem:[#allocation2 + $0x21] sm:$0xff]
    %v266 = vmul.f32 %v264, %v129
    %v267 = vmul.f32 %v265, %v129
    %v268 = vadd.f32 %v262, %v266
    %v269 = vadd.f32 %v263, %v267
    %v270 = vmul.f32 %v264, %v140
    %v271 = vmul.f32 %v265, %v140
    %274 = vrot.lane.b32.xlu0 %v270, 124
    %v275 = vpop.permute.xlu0 %274
    %276 = vrot.lane.b32.xlu0 %v271, 124
    %v277 = vpop.permute.xlu0 %276
    %v280 = vadd.f32 %v268, %v275
    %v281 = vadd.f32 %v269, %v277
    %v282 = vmul.f32 %v264, %v160
    %v283 = vmul.f32 %v265, %v160
    %286 = vrot.lane.b32.xlu0 %v282, 120
    %v287 = vpop.permute.xlu0 %286
    %288 = vrot.lane.b32.xlu0 %v283, 120
    %v289 = vpop.permute.xlu0 %288
    %v292 = vadd.f32 %v280, %v287
    %v293 = vadd.f32 %v281, %v289
    %v294 = vld [vmem:[#allocation2 + $0x1a] sm:$0xff]
    %v295 = vld [vmem:[#allocation2 + $0x22] sm:$0xff]
    %v296 = vmul.f32 %v294, %v179
    %v297 = vmul.f32 %v295, %v179
    %v298 = vadd.f32 %v292, %v296
    %v299 = vadd.f32 %v293, %v297
    %v300 = vmul.f32 %v294, %v190
    %v301 = vmul.f32 %v295, %v190
    %304 = vrot.lane.b32.xlu0 %v300, 124
    %v305 = vpop.permute.xlu0 %304
    %306 = vrot.lane.b32.xlu0 %v301, 124
    %v307 = vpop.permute.xlu0 %306
    %v310 = vadd.f32 %v298, %v305
    %v311 = vadd.f32 %v299, %v307
    %v312 = vmul.f32 %v294, %v210
    %v313 = vmul.f32 %v295, %v210
    %316 = vrot.lane.b32.xlu0 %v312, 120
    %v317 = vpop.permute.xlu0 %316
    %318 = vrot.lane.b32.xlu0 %v313, 120
    %v319 = vpop.permute.xlu0 %318
    %v322 = vadd.f32 %v310, %v317
    %v323 = vadd.f32 %v311, %v319
    %v324 = vadd.f32 %v322, %v228
    %v325 = vadd.f32 %v323, %v228
    %v326 = vmax.f32 %v324, 0.0
    %v327 = vmax.f32 %v325, 0.0
    %v329 = vlaneseq
    %v330 = vshrl.u32 %v329, 7
    %v331 = vsub.s32 0, %v330
    %v332 = vrot.slane %v73, %v331
    %vm334 = vcmask 523264
    %v336 = vsel %vm334, %v232, 0
    %v339 = vsel %vm334, %v233, 0
    %v342 = vsel %vm334, %v326, 0
    %v345 = vsel %vm334, %v327, 0
    %347 = vmatprep.subr.mxu0 0.0
    %348 = vmatpush1.msra.mxu0 %v65
    %349 = vmatprep.subr.mxu0 0.0
    %350 = vmatpush1.msra.mxu0 %v66
    %351 = vmatprep.subr.mxu0 0.0
    %352 = vmatpush1.msra.mxu0 %v67
    %353 = vmatprep.subr.mxu0 0.0
    %354 = vmatpush1.msra.mxu0 %v68
    %355 = vmatprep.subr.mxu0 0.0
    %356 = vmatpush1.msra.mxu0 %v69
    %357 = vmatprep.subr.mxu0 0.0
    %358 = vmatpush1.msra.mxu0 %v70
    %359 = vmatprep.subr.mxu0 0.0
    %360 = vmatpush1.msra.mxu0 %v71
    %361 = vmatprep.subr.mxu0 0.0
    %362 = vmatpush1.msra.mxu0 %v72
    %363 = vmatprep.subr.mxu0 0.0
    %364 = vmatpush1.msra.mxu0 0.0
    %365 = vmatprep.subr.mxu0 0.0
    %366 = vmatpush1.msra.mxu0 0.0
    %367 = vmatprep.subr.mxu0 0.0
    %368 = vmatpush1.msra.mxu0 0.0
    %369 = vmatprep.subr.mxu0 0.0
    %370 = vmatpush1.msra.mxu0 0.0
    %371 = vmatprep.subr.mxu0 0.0
    %372 = vmatpush1.msra.mxu0 0.0
    %373 = vmatprep.subr.mxu0 0.0
    %374 = vmatpush1.msra.mxu0 0.0
    %375 = vmatprep.subr.mxu0 0.0
    %376 = vmatpush1.msra.mxu0 0.0
    %377 = vmatprep.subr.mxu0 0.0
    %378 = vmatpush1.msra.mxu0 0.0
    %379 = vmatprep.subr.mxu0 0.0
    %380 = vmatpush1.msra.mxu0 0.0
    %381 = vmatprep.subr.mxu0 0.0
    %382 = vmatpush1.msra.mxu0 0.0
    %383 = vmatprep.subr.mxu0 0.0
    %384 = vmatpush1.msra.mxu0 0.0
    %385 = vmatprep.subr.mxu0 0.0
    %386 = vmatpush1.msra.mxu0 0.0
    %387 = vmatprep.subr.mxu0 0.0
    %388 = vmatpush1.msra.mxu0 0.0
    %389 = vmatprep.subr.mxu0 0.0
    %390 = vmatpush1.msra.mxu0 0.0
    %391 = vmatprep.subr.mxu0 0.0
    %392 = vmatpush1.msra.mxu0 0.0
    %393 = vmatprep.subr.mxu0 0.0
    %394 = vmatpush1.msra.mxu0 0.0
    %395 = vmatprep.subr.mxu0 0.0
    %396 = vmatpush1.msra.mxu0 0.0
    %397 = vmatprep.subr.mxu0 0.0
    %398 = vmatpush1.msra.mxu0 0.0
    %399 = vmatprep.subr.mxu0 0.0
    %400 = vmatpush1.msra.mxu0 0.0
    %401 = vmatprep.subr.mxu0 0.0
    %402 = vmatpush1.msra.mxu0 0.0
    %403 = vmatprep.subr.mxu0 0.0
    %404 = vmatpush1.msra.mxu0 0.0
    %405 = vmatprep.subr.mxu0 0.0
    %406 = vmatpush1.msra.mxu0 0.0
    %407 = vmatprep.subr.mxu0 0.0
    %408 = vmatpush1.msra.mxu0 0.0
    %409 = vmatprep.subr.mxu0 0.0
    %410 = vmatpush1.msra.mxu0 0.0
    %411 = vmatprep.mubr.f32.mxu0 0.0
    %412 = vmatmul.mubr.f32.gmra.mrb[0].mxu0 %v336
    %v413 = vpop.f32.mrb[0].mxu0
    %v414 = vadd.f32 %v332, %v413
    %v415 = vpop.f32.mrb[0].mxu0
    %416 = vmatprep.mubr.f32.mxu0 0.0
    %417 = vmatmul.mubr.f32.gmra.mrb[0].mxu0 %v339
    %v418 = vpop.f32.mrb[0].mxu0
    %v419 = vadd.f32 %v332, %v418
    %v420 = vpop.f32.mrb[0].mxu0
    %421 = vmatprep.mubr.f32.mxu0 0.0
    %422 = vmatmul.mubr.f32.gmra.mrb[0].mxu0 %v342
    %v423 = vpop.f32.mrb[0].mxu0
    %v424 = vadd.f32 %v332, %v423
    %v425 = vpop.f32.mrb[0].mxu0
    %426 = vmatprep.mubr.f32.mxu0 0.0
    %427 = vmatmul.mubr.f32.gmra.mrb[0].mxu0 %v345
    %v428 = vpop.f32.mrb[0].mxu0
    %v429 = vadd.f32 %v332, %v428
    %v430 = vpop.f32.mrb[0].mxu0
    %431 = vdwg.mxu0
    %v432 = vmax.f32 %v414, 0.0
    %v433 = vmax.f32 %v419, 0.0
    %v434 = vmax.f32 %v424, 0.0
    %v435 = vmax.f32 %v429, 0.0
    %436 = vst [vmem:[#allocation8] sm:$0xff] %v432
    %437 = vst [vmem:[#allocation8 + $0x8] sm:$0xff] %v433
    %438 = vst [vmem:[#allocation8 + $0x10] sm:$0xff] %v434
    %439 = vst [vmem:[#allocation8 + $0x18] sm:$0xff] %v435
    // Predicated region
    $region34: #{tpu_custom_call.1} parent=1 // pred_check
      _
    $region35: #{tpu_custom_call.1} parent=1 // pred_check_branch
      %441 = sbr.rel (0) target = $region37
    $region36: #{tpu_custom_call.1} parent=1 // pred_region
      %s443 = ssub.s32 512, 512
      %444 = vsyncadd [#allocation4], %s443
      %s445 = sshll.u32 [#allocation8], 4
      %s446 = int_to_ptr.vmem [resolvable:$true] %s445
      %451 = dma.vmem_to_hbm [thread:$0]  %s446, 512, %s5, [#allocation4], 128, 128, 8
    $region37: #{tpu_custom_call.1} parent=1 // pred_fallthru
      _
    // Predicated region
    $region38: #{tpu_custom_call.1} parent=1 // pred_check
      _
    $region39: #{tpu_custom_call.1} parent=1 // pred_check_branch
      %453 = sbr.rel (0) target = $region41
    $region40: #{tpu_custom_call.1} parent=1 // pred_region
      %454 = dma.done [#allocation4], 512
    $region41: #{tpu_custom_call.1} parent=1 // pred_fallthru
      _
    %455 = vsyncpa [#allocation3], 1
    %456 = vsyncpa [#allocation6], 1
    %457 = vsyncpa [#allocation4], 1

</llo_original>
